<compile_context>
chip_gen: v7x
topology: tpu7x:2x2x1
jax: 0.10.0
libtpu: 0.0.40
codegen_flags: <defaults>
</compile_context>

<pallas_src>
import math
from functools import partial

import jax
import jax.numpy as jnp
from jax.experimental import pallas as pl
from jax.experimental.pallas import tpu as pltpu

_LANE = 128
_SUBLANE = 8


def _default_block_bytes() -> int:
    """Per-generation block budget (≤2 MiB v5e, ~4 MiB v6e/v7x); 2 MiB fallback."""
    try:
        kind = jax.devices()[0].device_kind.lower()
    except Exception:  # pragma: no cover - device query failure
        return 2 * 1024 * 1024
    if "v6" in kind or "v7" in kind:
        return 4 * 1024 * 1024
    return 2 * 1024 * 1024


def _copy_kernel(x_ref, o_ref):
    # Empty nn.Sequential => forward is identity. Pass the tile through VMEM.
    o_ref[...] = x_ref[...]


def _choose_layout(shape, itemsize, budget):
    """Pick a lane-dense 2-D layout (rows, cols) and block (bm, bn).

    Blocks satisfy the (8,128) rule: bm is a multiple of 8 or the full row
    extent; bn is a multiple of 128 or the full column extent.
    """
    total = int(math.prod(shape)) if shape else 1
    n = shape[0] if len(shape) >= 1 else 1
    chw = total // max(n, 1)

    if total % _LANE == 0:
        # Lane-dense reshape: grow the lane dim (multiple of 128) as far as the
        # budget allows with at least 8 rows per block -> unmasked vst stores.
        max_lanes = max(_LANE, (budget // (_SUBLANE * itemsize)) // _LANE * _LANE)
        cols = _LANE
        while cols * 2 <= max_lanes and total % (cols * 2) == 0:
            cols *= 2
        rows = total // cols
        bn = cols
        bm_budget = max(_SUBLANE, (budget // (bn * itemsize)) // _SUBLANE * _SUBLANE)
        bm = rows if rows <= bm_budget else bm_budget
        return rows, cols, bm, bn

    # Unaligned fallback: keep (n, chw); last dim full-extent (legal block, but
    # masked partial stores).  Bound bm by the budget so large unaligned images
    # don't blow the scoped VMEM limit.
    rows, cols = n, chw
    bn = cols
    row_bytes = max(cols * itemsize, 1)
    bm_fit = max(1, budget // row_bytes)
    if rows <= max(bm_fit, _SUBLANE):
        bm = rows
    else:
        bm = max(_SUBLANE, (bm_fit // _SUBLANE) * _SUBLANE)
    # TODO(synk): for huge unaligned rows (> ~4 MiB each) an explicit padded
    # copy would be needed to keep blocks within the scoped VMEM limit.
    return rows, cols, bm, bn


def _copy_impl(xb, max_block_bytes, alias):
    itemsize = jnp.dtype(xb.dtype).itemsize
    rows, cols, bm, bn = _choose_layout(xb.shape, itemsize, max_block_bytes)
    flat = xb.reshape(rows, cols)  # lane-dense 2-D slab (reshape is a bitcast)

    grid = (pl.cdiv(rows, bm), pl.cdiv(cols, bn))

    # in + out, double-buffered; clamp to 32 MiB (safe on v5e/v6e/v7x).
    needed = 4 * bm * bn * itemsize
    vmem_limit = min(max(needed + (1 << 20), 16 << 20), 32 << 20)

    out_flat = pl.pallas_call(
        _copy_kernel,
        out_shape=jax.ShapeDtypeStruct(flat.shape, flat.dtype),
        grid=grid,
        in_specs=[pl.BlockSpec((bm, bn), lambda i, j: (i, j))],
        out_specs=pl.BlockSpec((bm, bn), lambda i, j: (i, j)),
        input_output_aliases=({0: 0} if alias else {}),
        compiler_params=pltpu.CompilerParams(
            dimension_semantics=("parallel", "parallel"),
            vmem_limit_bytes=vmem_limit,
        ),
    )(flat)

    return out_flat.reshape(xb.shape)


@partial(jax.jit, static_argnames=("max_block_bytes",))
def _forward_pallas_copy(xb, *, max_block_bytes):
    # No donation guaranteed -> no alias (avoids XLA's defensive extra copy).
    return _copy_impl(xb, max_block_bytes, alias=False)


@partial(jax.jit, static_argnames=("max_block_bytes",), donate_argnums=(0,))
def _forward_pallas_copy_donated(xb, *, max_block_bytes):
    # Input buffer is donated -> input_output_aliases is actually in-place.
    return _copy_impl(xb, max_block_bytes, alias=True)


def natural_scene_classification_forward(
    xb: jax.Array,
    *,
    force_pallas_copy: bool = False,
    donate: bool = False,
    max_block_bytes: int | None = None,
) -> jax.Array:
    """Forward pass of NaturalSceneClassification (empty Sequential => identity).

    Default path returns the input untouched (zero HBM traffic, no kernel).
    `force_pallas_copy=True` routes through the tiled Pallas copy kernel;
    `donate=True` additionally donates `xb` so the copy aliases in place
    (the caller must not reuse `xb` afterwards).
    """
    if not force_pallas_copy:
        return xb
    if max_block_bytes is None:
        max_block_bytes = _default_block_bytes()
    if donate:
        return _forward_pallas_copy_donated(xb, max_block_bytes=max_block_bytes)
    return _forward_pallas_copy(xb, max_block_bytes=max_block_bytes)


if __name__ == "__main__":
    key = jax.random.PRNGKey(0)
    # Small NCHW input consistent with the module's image-classification use.
    x = jax.random.normal(key, (2, 4, 16, 16), dtype=jnp.float32)

    # 1) Default fast path: identity returns the input directly.
    y_fast = natural_scene_classification_forward(x)
    assert y_fast.shape == x.shape and y_fast.dtype == x.dtype
    assert bool(jnp.array_equal(y_fast, x))

    # 2) Forced Pallas copy, lane-dense reshape (2048 elems -> (1, 2048) slab).
    y = natural_scene_classification_forward(x, force_pallas_copy=True)
    jax.block_until_ready(y)
    assert y.shape == x.shape and y.dtype == x.dtype
    assert bool(jnp.array_equal(y, x))

    # 3) Multi-block tiled grid on the same input (4 KiB budget ->
    #    layout (16, 128), blocks (8, 128), grid=(2, 1)).
    y_tiled = natural_scene_classification_forward(
        x, force_pallas_copy=True, max_block_bytes=4096
    )
    jax.block_until_ready(y_tiled)
    assert bool(jnp.array_equal(y_tiled, x))

    # 4) Lane-unaligned total (2*3*10*10 = 600): full-extent fallback block.
    x2 = jax.random.normal(jax.random.PRNGKey(0), (2, 3, 10, 10), dtype=jnp.float32)
    y2 = natural_scene_classification_forward(x2, force_pallas_copy=True)
    jax.block_until_ready(y2)
    assert y2.shape == x2.shape and bool(jnp.array_equal(y2, x2))

    # 5) Donated path: alias is genuinely in-place (fresh copy so x stays valid).
    x3 = x + 0.0
    y3 = natural_scene_classification_forward(
        x3, force_pallas_copy=True, donate=True
    )
    jax.block_until_ready(y3)
    assert y3.shape == x.shape and bool(jnp.array_equal(y3, x))

    print("KERNEL_OK")
</pallas_src>

<mosaic_0001>
module attributes {stable_mosaic.version = 11 : i64} {
  func.func @_copy_kernel(%arg0: i32, %arg1: i32, %arg2: memref<1x2048xf32, #tpu.memory_space<vmem>>, %arg3: memref<1x2048xf32, #tpu.memory_space<vmem>>) attributes {dimension_semantics = [#tpu.dimension_semantics<parallel>, #tpu.dimension_semantics<parallel>], iteration_bounds = array<i64: 1, 1>, scalar_prefetch = 0 : i64, scratch_operands = 0 : i64, tpu.core_type = #tpu.core_type<tc>, window_params = [{transform_indices = @transform_0, window_bounds = array<i64: 1, 2048>}, {transform_indices = @transform_1, window_bounds = array<i64: 1, 2048>}]} {
    %c0 = arith.constant 0 : index
    %c0_0 = arith.constant 0 : index
    %0 = vector.load %arg2[%c0, %c0_0] : memref<1x2048xf32, #tpu.memory_space<vmem>>, vector<1x2048xf32>
    %c0_1 = arith.constant 0 : index
    %c0_2 = arith.constant 0 : index
    %1 = vector.load %arg3[%c0_1, %c0_2] : memref<1x2048xf32, #tpu.memory_space<vmem>>, vector<1x2048xf32>
    tpu.vector_store %arg3[%c0_1, %c0_2], %0 {strides = array<i32>} : memref<1x2048xf32, #tpu.memory_space<vmem>>, vector<1x2048xf32>,
    return
  }
  func.func @transform_0(%arg0: i32, %arg1: i32) -> (i32, i32) {
    %c0_i32 = arith.constant 0 : i32
    return %arg0, %arg1 : i32, i32
  }
  func.func @transform_1(%arg0: i32, %arg1: i32) -> (i32, i32) {
    %c0_i32 = arith.constant 0 : i32
    return %arg0, %arg1 : i32, i32
  }
}

</mosaic_0001>

<llo_original>
// kernel: _forward_pallas_copy.1
$region0: #{_forward_pallas_copy.1}
  #allocation0 [shape = 'u32[]', space=smem, size = 0x4, offset = 0x4, fixed_abs, tag = 'smem constant byte address 0x4 - core index']
  #allocation1 [shape = 'u32[144,128]{1,0:T(1,128)}', space=vmem, size = 0x12000, scoped, tag = 'internal scratch']
  %s0 = inlined_call_operand.vmem [shape: f32[1,2048], index: 0, kind: input, shape index: {}]
  %s1 = inlined_call_operand.vmem [shape: f32[1,2048], index: 1, kind: output, shape index: {}]
  %s2 = sld [smem:[#allocation0]]
  $region14: #{_forward_pallas_copy.1} parent=0
    _
  %s4 = ssub.s32 1, %s2
  %s5 = scalar_select 0, %s4, %s2
  // Predicated region
  $region2: #{_forward_pallas_copy.1} parent=0 // pred_check
    _
  $region3: #{_forward_pallas_copy.1} parent=0 // pred_check_branch
    %7 = sbr.rel (0) target = $region5
  $region4: #{_forward_pallas_copy.1} parent=0 // pred_region
    _
  $region5: #{_forward_pallas_copy.1} parent=0 // pred_fallthru
    _
  %v8 = vld [vmem:[%s0] sm:$0xff]
  %v9 = vld [vmem:[%s0 + $0x8] sm:$0xff]
  %10 = vst [vmem:[%s1] sm:$0xff] %v8
  %11 = vst [vmem:[%s1 + $0x8] sm:$0xff] %v9
  // Predicated region
  $region6: #{_forward_pallas_copy.1} parent=0 // pred_check
    _
  $region7: #{_forward_pallas_copy.1} parent=0 // pred_check_branch
    %13 = sbr.rel (0) target = $region9
  $region8: #{_forward_pallas_copy.1} parent=0 // pred_region
    _
  $region9: #{_forward_pallas_copy.1} parent=0 // pred_fallthru
    _
  // Predicated region
  $region10: #{_forward_pallas_copy.1} parent=0 // pred_check
    _
  $region11: #{_forward_pallas_copy.1} parent=0 // pred_check_branch
    %15 = sbr.rel (0) target = $region13
  $region12: #{_forward_pallas_copy.1} parent=0 // pred_region
    _
  $region13: #{_forward_pallas_copy.1} parent=0 // pred_fallthru
    _

</llo_original>
